<compile_context>
chip_gen: v7x
topology: tpu7x:2x2x1
jax: 0.10.0
libtpu: 0.0.40
codegen_flags: <defaults>
</compile_context>

<pallas_src>
import functools

import jax
import jax.numpy as jnp
from jax.experimental import pallas as pl
from jax.experimental.pallas import tpu as pltpu

_NEG_BIG = -1e30  # bias value for padded output columns -> exp underflows to exactly 0


def gumbel_softmax_kernel(x_ref, w_ref, b_ref, g_ref, o_ref, *, inv_temperature):
    # logits = x @ W^T + b    (W already transposed & lane-padded by the wrapper)
    logits = jnp.dot(x_ref[...], w_ref[...], preferred_element_type=jnp.float32)
    # z = (logits + bias + gumbel) * (1/T); padded columns carry bias = -1e30 -> softmax weight 0
    z = (logits + b_ref[...] + g_ref[...]) * inv_temperature

    # Numerically stable softmax over the last (lane) axis.
    z = z - jnp.max(z, axis=-1, keepdims=True)
    e = jnp.exp(z)
    denom = jnp.sum(e, axis=-1, keepdims=True)
    o_ref[...] = (e * (1.0 / denom)).astype(o_ref.dtype)


def gumbel_softmax_layer(x, weight, bias, key, *, temperature=1.0, tile_b=None):
    """x: (B, d_in) f32; weight: (d_out, d_in); bias: (d_out,); key: jax PRNG key."""
    B, d_in = x.shape
    d_out = weight.shape[0]

    # --- batch tiling: full batch if it is small, otherwise 512-row tiles (multiple of 8) ---
    if tile_b is None:
        tile_b = B if B <= 512 else 512
    B_p = ((B + tile_b - 1) // tile_b) * tile_b
    x_p = jnp.pad(x, ((0, B_p - B), (0, 0)))

    # --- lane-dense feature axis: pad d_out up to a multiple of 128 ---
    d_out_p = ((d_out + 127) // 128) * 128
    w_t = jnp.pad(weight.T.astype(jnp.float32), ((0, 0), (0, d_out_p - d_out)))   # (d_in, d_out_p)
    b_p = jnp.full((1, d_out_p), _NEG_BIG, jnp.float32).at[0, :d_out].set(bias)   # (1, d_out_p)

    # Gumbel(0,1) noise generated host-side (equivalent to -log(Exp(1)) in the PyTorch module).
    # TODO(synk): on real TPU silicon this could use pltpu.prng_random_bits inside the kernel,
    # but that primitive has no interpret/CPU lowering, so noise is supplied as an input.
    gumbel = jax.random.gumbel(key, (B_p, d_out_p), jnp.float32)

    kernel = functools.partial(
        gumbel_softmax_kernel, inv_temperature=float(1.0 / temperature)
    )

    out = pl.pallas_call(
        kernel,
        out_shape=jax.ShapeDtypeStruct((B_p, d_out_p), jnp.float32),
        grid=(B_p // tile_b,),
        in_specs=[
            pl.BlockSpec((tile_b, d_in), lambda i: (i, 0)),       # x tile
            pl.BlockSpec((d_in, d_out_p), lambda i: (0, 0)),      # weight (resident)
            pl.BlockSpec((1, d_out_p), lambda i: (0, 0)),         # bias (resident)
            pl.BlockSpec((tile_b, d_out_p), lambda i: (i, 0)),    # gumbel noise tile
        ],
        out_specs=pl.BlockSpec((tile_b, d_out_p), lambda i: (i, 0)),
        compiler_params=pltpu.CompilerParams(
            dimension_semantics=("parallel",),                    # batch axis is independent
        ),
    )(x_p, w_t, b_p, gumbel)

    return out[:B, :d_out]


if __name__ == "__main__":
    input_dim = 32
    output_dim = 16
    batch = 16
    temperature = 1.0

    key = jax.random.PRNGKey(0)
    kx, kw, kb, kg = jax.random.split(key, 4)

    # Deterministic synthetic parameters (mimic nn.Linear's uniform(-1/sqrt(in), 1/sqrt(in)) init).
    bound = 1.0 / (input_dim ** 0.5)
    weight = jax.random.uniform(kw, (output_dim, input_dim), jnp.float32, -bound, bound)
    bias = jax.random.uniform(kb, (output_dim,), jnp.float32, -bound, bound)

    x = jax.random.normal(kx, (batch, input_dim), jnp.float32)

    out = gumbel_softmax_layer(x, weight, bias, kg, temperature=temperature)
    out = jax.block_until_ready(out)

    # Sanity: softmax rows sum to 1 and values are in [0, 1].
    row_sums = jnp.sum(out, axis=-1)
    assert out.shape == (batch, output_dim)
    assert bool(jnp.all(jnp.isfinite(out)))
    assert bool(jnp.all(jnp.abs(row_sums - 1.0) < 1e-5))
    assert bool(jnp.all(out >= 0.0)) and bool(jnp.all(out <= 1.0))

    print("KERNEL_OK")
</pallas_src>

<mosaic_0001>
module attributes {stable_mosaic.version = 11 : i64} {
  func.func @gumbel_softmax_kernel(%arg0: i32, %arg1: memref<16x32xf32, #tpu.memory_space<vmem>>, %arg2: memref<32x128xf32, #tpu.memory_space<vmem>>, %arg3: memref<1x128xf32, #tpu.memory_space<vmem>>, %arg4: memref<16x128xf32, #tpu.memory_space<vmem>>, %arg5: memref<16x128xf32, #tpu.memory_space<vmem>>) attributes {dimension_semantics = [#tpu.dimension_semantics<parallel>], iteration_bounds = array<i64: 1>, scalar_prefetch = 0 : i64, scratch_operands = 0 : i64, tpu.core_type = #tpu.core_type<tc>, window_params = [{transform_indices = @transform_0, window_bounds = array<i64: 16, 32>}, {pipeline_mode = #tpu.pipeline_mode<synchronous>, transform_indices = @transform_1, window_bounds = array<i64: 32, 128>}, {pipeline_mode = #tpu.pipeline_mode<synchronous>, transform_indices = @transform_2, window_bounds = array<i64: 1, 128>}, {transform_indices = @transform_3, window_bounds = array<i64: 16, 128>}, {transform_indices = @transform_4, window_bounds = array<i64: 16, 128>}]} {
    %c0 = arith.constant 0 : index
    %c0_0 = arith.constant 0 : index
    %0 = vector.load %arg1[%c0, %c0_0] : memref<16x32xf32, #tpu.memory_space<vmem>>, vector<16x32xf32>
    %c0_1 = arith.constant 0 : index
    %c0_2 = arith.constant 0 : index
    %1 = vector.load %arg2[%c0_1, %c0_2] : memref<32x128xf32, #tpu.memory_space<vmem>>, vector<32x128xf32>
    %cst = arith.constant dense<0.000000e+00> : vector<16x128xf32>
    %2 = tpu.matmul %0, %1, %cst {dimension_numbers = #tpu.dot_dimension_numbers<[1], [0], [0], [1], [0, 0, 1, 1], [], []>} : vector<16x32xf32>, vector<32x128xf32>, vector<16x128xf32> -> vector<16x128xf32>
    %c0_3 = arith.constant 0 : index
    %c0_4 = arith.constant 0 : index
    %3 = vector.load %arg3[%c0_3, %c0_4] : memref<1x128xf32, #tpu.memory_space<vmem>>, vector<1x128xf32>
    %4 = vector.broadcast %3 : vector<1x128xf32> to vector<16x128xf32>
    %5 = arith.addf %2, %4 : vector<16x128xf32>
    %c0_5 = arith.constant 0 : index
    %c0_6 = arith.constant 0 : index
    %6 = vector.load %arg4[%c0_5, %c0_6] : memref<16x128xf32, #tpu.memory_space<vmem>>, vector<16x128xf32>
    %7 = arith.addf %5, %6 : vector<16x128xf32>
    %cst_7 = arith.constant 1.000000e+00 : f32
    %8 = vector.broadcast %cst_7 : f32 to vector<16x128xf32>
    %9 = arith.mulf %7, %8 : vector<16x128xf32>
    %cst_8 = arith.constant dense<0xFF800000> : vector<16xf32>
    %10 = vector.multi_reduction <maximumf>, %9, %cst_8 [1] : vector<16x128xf32> to vector<16xf32>
    %11 = vector.shape_cast %10 : vector<16xf32> to vector<16x1xf32>
    %12 = vector.broadcast %11 : vector<16x1xf32> to vector<16x128xf32>
    %13 = arith.subf %9, %12 : vector<16x128xf32>
    %14 = math.exp %13 : vector<16x128xf32>
    %cst_9 = arith.constant dense<0.000000e+00> : vector<16xf32>
    %15 = vector.multi_reduction <add>, %14, %cst_9 [1] : vector<16x128xf32> to vector<16xf32>
    %16 = vector.shape_cast %15 : vector<16xf32> to vector<16x1xf32>
    %cst_10 = arith.constant 1.000000e+00 : f32
    %17 = vector.broadcast %cst_10 : f32 to vector<16x1xf32>
    %18 = arith.divf %17, %16 : vector<16x1xf32>
    %19 = vector.broadcast %18 : vector<16x1xf32> to vector<16x128xf32>
    %20 = arith.mulf %14, %19 : vector<16x128xf32>
    %c0_11 = arith.constant 0 : index
    %c0_12 = arith.constant 0 : index
    %21 = vector.load %arg5[%c0_11, %c0_12] : memref<16x128xf32, #tpu.memory_space<vmem>>, vector<16x128xf32>
    tpu.vector_store %arg5[%c0_11, %c0_12], %20 {strides = array<i32>} : memref<16x128xf32, #tpu.memory_space<vmem>>, vector<16x128xf32>,
    return
  }
  func.func @transform_0(%arg0: i32) -> (i32, i32) {
    %c0_i32 = arith.constant 0 : i32
    %c0_i32_0 = arith.constant 0 : i32
    return %arg0, %c0_i32 : i32, i32
  }
  func.func @transform_1(%arg0: i32) -> (i32, i32) {
    %c0_i32 = arith.constant 0 : i32
    %c0_i32_0 = arith.constant 0 : i32
    %c0_i32_1 = arith.constant 0 : i32
    return %c0_i32, %c0_i32_0 : i32, i32
  }
  func.func @transform_2(%arg0: i32) -> (i32, i32) {
    %c0_i32 = arith.constant 0 : i32
    %c0_i32_0 = arith.constant 0 : i32
    %c0_i32_1 = arith.constant 0 : i32
    return %c0_i32, %c0_i32_0 : i32, i32
  }
  func.func @transform_3(%arg0: i32) -> (i32, i32) {
    %c0_i32 = arith.constant 0 : i32
    %c0_i32_0 = arith.constant 0 : i32
    return %arg0, %c0_i32 : i32, i32
  }
  func.func @transform_4(%arg0: i32) -> (i32, i32) {
    %c0_i32 = arith.constant 0 : i32
    %c0_i32_0 = arith.constant 0 : i32
    return %arg0, %c0_i32 : i32, i32
  }
}

</mosaic_0001>

<llo_original>
// kernel: tpu_custom_call.1
$region0: #{tpu_custom_call.1}
  #allocation0 [shape = 'u32[]', space=smem, size = 0x4, offset = 0x4, fixed_abs, tag = 'smem constant byte address 0x4 - core index']
  #allocation1 [shape = 'u32[144,128]{1,0:T(1,128)}', space=vmem, size = 0x12000, scoped, tag = 'internal scratch']
  %s0 = inlined_call_operand.hbm [shape: f32[16,32], index: 0, kind: input, shape index: {}]
  %s1 = inlined_call_operand.hbm [shape: f32[32,128], index: 1, kind: input, shape index: {}]
  %s2 = inlined_call_operand.vmem [shape: f32[1,128], index: 2, kind: input, shape index: {}]
  %s3 = inlined_call_operand.hbm [shape: f32[16,128], index: 3, kind: input, shape index: {}]
  %s4 = inlined_call_operand.hbm [shape: f32[16,128], index: 4, kind: output, shape index: {}]
  %s5 = sld [smem:[#allocation0]]
  $region38: #{tpu_custom_call.1} parent=0
    _
  %s7 = ssub.s32 1, %s5
  %s8 = scalar_select 0, %s7, %s5
  $region1: #{tpu_custom_call.1} parent=0
    #allocation2 [shape = 'u8[8192]{0}', space=vmem, size = 0x2000, scoped, tag = 'input window, operand 0, single buffered']
    #allocation3 [shape = 's32[1]{0}', space=sflag, size = 0x4, scoped, tag = 'scoped memory for tpu_custom_call.1']
    #allocation4 [shape = 's32[1]{0}', space=sflag, size = 0x4, scoped, tag = 'scoped memory for tpu_custom_call.1']
    #allocation5 [shape = 'u8[16384]{0}', space=vmem, size = 0x4000, scoped, tag = 'input window, operand 1, single buffered']
    #allocation6 [shape = 's32[1]{0}', space=sflag, size = 0x4, scoped, tag = 'scoped memory for tpu_custom_call.1']
    #allocation7 [shape = 'u8[8192]{0}', space=vmem, size = 0x2000, scoped, tag = 'input window, operand 3, single buffered']
    #allocation8 [shape = 'u8[8192]{0}', space=vmem, size = 0x2000, scoped, tag = 'output window, operand 0, single buffered']
    %9 = vsyncpa [#allocation3], 0
    %10 = vsyncpa [#allocation6], 0
    %11 = vsyncpa [#allocation4], 0
    // Predicated region
    $region2: #{tpu_custom_call.1} parent=1 // pred_check
      _
    $region3: #{tpu_custom_call.1} parent=1 // pred_check_branch
      %13 = sbr.rel (0) target = $region5
    $region4: #{tpu_custom_call.1} parent=1 // pred_region
      %s15 = ssub.s32 256, 256
      %16 = vsyncadd [#allocation3], %s15
      %s17 = sshll.u32 [#allocation2], 4
      %s18 = int_to_ptr.vmem [resolvable:$true] %s17
      %23 = dma.hbm_to_vmem [thread:$0]  %s0, 256, %s18, [#allocation3], 128, 128, 8
    $region5: #{tpu_custom_call.1} parent=1 // pred_fallthru
      _
    // Predicated region
    $region6: #{tpu_custom_call.1} parent=1 // pred_check
      _
    $region7: #{tpu_custom_call.1} parent=1 // pred_check_branch
      %25 = sbr.rel (0) target = $region9
    $region8: #{tpu_custom_call.1} parent=1 // pred_region
      %s27 = ssub.s32 512, 512
      %28 = vsyncadd [#allocation6], %s27
      %s29 = sshll.u32 [#allocation5], 4
      %s30 = int_to_ptr.vmem [resolvable:$true] %s29
      %35 = dma.hbm_to_vmem [thread:$0]  %s1, 512, %s30, [#allocation6], 128, 128, 8
    $region9: #{tpu_custom_call.1} parent=1 // pred_fallthru
      _
    // Predicated region
    $region10: #{tpu_custom_call.1} parent=1 // pred_check
      _
    $region11: #{tpu_custom_call.1} parent=1 // pred_check_branch
      %37 = sbr.rel (0) target = $region13
    $region12: #{tpu_custom_call.1} parent=1 // pred_region
      _
    $region13: #{tpu_custom_call.1} parent=1 // pred_fallthru
      _
    // Predicated region
    $region14: #{tpu_custom_call.1} parent=1 // pred_check
      _
    $region15: #{tpu_custom_call.1} parent=1 // pred_check_branch
      %39 = sbr.rel (0) target = $region17
    $region16: #{tpu_custom_call.1} parent=1 // pred_region
      %s41 = ssub.s32 256, 256
      %42 = vsyncadd [#allocation6], %s41
      %s43 = sshll.u32 [#allocation7], 4
      %s44 = int_to_ptr.vmem [resolvable:$true] %s43
      %49 = dma.hbm_to_vmem [thread:$0]  %s3, 256, %s44, [#allocation6], 128, 128, 8
    $region17: #{tpu_custom_call.1} parent=1 // pred_fallthru
      _
    // Predicated region
    $region18: #{tpu_custom_call.1} parent=1 // pred_check
      _
    $region19: #{tpu_custom_call.1} parent=1 // pred_check_branch
      %51 = sbr.rel (0) target = $region21
    $region20: #{tpu_custom_call.1} parent=1 // pred_region
      %52 = dma.done [#allocation3], 256
    $region21: #{tpu_custom_call.1} parent=1 // pred_fallthru
      _
    // Predicated region
    $region22: #{tpu_custom_call.1} parent=1 // pred_check
      _
    $region23: #{tpu_custom_call.1} parent=1 // pred_check_branch
      %54 = sbr.rel (0) target = $region25
    $region24: #{tpu_custom_call.1} parent=1 // pred_region
      %55 = dma.done [#allocation6], 512
    $region25: #{tpu_custom_call.1} parent=1 // pred_fallthru
      _
    // Predicated region
    $region26: #{tpu_custom_call.1} parent=1 // pred_check
      _
    $region27: #{tpu_custom_call.1} parent=1 // pred_check_branch
      %57 = sbr.rel (0) target = $region29
    $region28: #{tpu_custom_call.1} parent=1 // pred_region
      %58 = dma.done [#allocation6], 256
    $region29: #{tpu_custom_call.1} parent=1 // pred_fallthru
      _
    %v59 = vld [vmem:[#allocation2] sm:$0xff]
    %v60 = vld [vmem:[#allocation2 + $0x8] sm:$0xff]
    %v61 = vld [vmem:[#allocation5] sm:$0xff]
    %v62 = vld [vmem:[#allocation5 + $0x8] sm:$0xff]
    %v63 = vld [vmem:[#allocation5 + $0x10] sm:$0xff]
    %v64 = vld [vmem:[#allocation5 + $0x18] sm:$0xff]
    %v65 = vld [vmem:[%s2] sm:$0x1]
    %v67 = vlaneseq
    %v68 = vshrl.u32 %v67, 7
    %v69 = vsub.s32 0, %v68
    %v70 = vrot.slane %v65, %v69
    %vm72 = vcmask 261120
    %v74 = vsel %vm72, %v59, 0
    %v77 = vsel %vm72, %v60, 0
    %79 = vmatprep.subr.mxu0 0.0
    %80 = vmatpush1.msra.mxu0 %v61
    %81 = vmatprep.subr.mxu0 0.0
    %82 = vmatpush1.msra.mxu0 %v62
    %83 = vmatprep.subr.mxu0 0.0
    %84 = vmatpush1.msra.mxu0 %v63
    %85 = vmatprep.subr.mxu0 0.0
    %86 = vmatpush1.msra.mxu0 %v64
    %87 = vmatprep.subr.mxu0 0.0
    %88 = vmatpush1.msra.mxu0 0.0
    %89 = vmatprep.subr.mxu0 0.0
    %90 = vmatpush1.msra.mxu0 0.0
    %91 = vmatprep.subr.mxu0 0.0
    %92 = vmatpush1.msra.mxu0 0.0
    %93 = vmatprep.subr.mxu0 0.0
    %94 = vmatpush1.msra.mxu0 0.0
    %95 = vmatprep.subr.mxu0 0.0
    %96 = vmatpush1.msra.mxu0 0.0
    %97 = vmatprep.subr.mxu0 0.0
    %98 = vmatpush1.msra.mxu0 0.0
    %99 = vmatprep.subr.mxu0 0.0
    %100 = vmatpush1.msra.mxu0 0.0
    %101 = vmatprep.subr.mxu0 0.0
    %102 = vmatpush1.msra.mxu0 0.0
    %103 = vmatprep.subr.mxu0 0.0
    %104 = vmatpush1.msra.mxu0 0.0
    %105 = vmatprep.subr.mxu0 0.0
    %106 = vmatpush1.msra.mxu0 0.0
    %107 = vmatprep.subr.mxu0 0.0
    %108 = vmatpush1.msra.mxu0 0.0
    %109 = vmatprep.subr.mxu0 0.0
    %110 = vmatpush1.msra.mxu0 0.0
    %111 = vmatprep.subr.mxu0 0.0
    %112 = vmatpush1.msra.mxu0 0.0
    %113 = vmatprep.subr.mxu0 0.0
    %114 = vmatpush1.msra.mxu0 0.0
    %115 = vmatprep.subr.mxu0 0.0
    %116 = vmatpush1.msra.mxu0 0.0
    %117 = vmatprep.subr.mxu0 0.0
    %118 = vmatpush1.msra.mxu0 0.0
    %119 = vmatprep.subr.mxu0 0.0
    %120 = vmatpush1.msra.mxu0 0.0
    %121 = vmatprep.subr.mxu0 0.0
    %122 = vmatpush1.msra.mxu0 0.0
    %123 = vmatprep.subr.mxu0 0.0
    %124 = vmatpush1.msra.mxu0 0.0
    %125 = vmatprep.subr.mxu0 0.0
    %126 = vmatpush1.msra.mxu0 0.0
    %127 = vmatprep.subr.mxu0 0.0
    %128 = vmatpush1.msra.mxu0 0.0
    %129 = vmatprep.subr.mxu0 0.0
    %130 = vmatpush1.msra.mxu0 0.0
    %131 = vmatprep.subr.mxu0 0.0
    %132 = vmatpush1.msra.mxu0 0.0
    %133 = vmatprep.subr.mxu0 0.0
    %134 = vmatpush1.msra.mxu0 0.0
    %135 = vmatprep.subr.mxu0 0.0
    %136 = vmatpush1.msra.mxu0 0.0
    %137 = vmatprep.subr.mxu0 0.0
    %138 = vmatpush1.msra.mxu0 0.0
    %139 = vmatprep.subr.mxu0 0.0
    %140 = vmatpush1.msra.mxu0 0.0
    %141 = vmatprep.subr.mxu0 0.0
    %142 = vmatpush1.msra.mxu0 0.0
    %143 = vmatprep.mubr.f32.mxu0 0.0
    %144 = vmatmul.mubr.f32.gmra.mrb[0].mxu0 %v74
    %v145 = vpop.f32.mrb[0].mxu0
    %v146 = vadd.f32 %v70, %v145
    %v147 = vpop.f32.mrb[0].mxu0
    %148 = vmatprep.mubr.f32.mxu0 0.0
    %149 = vmatmul.mubr.f32.gmra.mrb[0].mxu0 %v77
    %v150 = vpop.f32.mrb[0].mxu0
    %v151 = vadd.f32 %v70, %v150
    %v152 = vpop.f32.mrb[0].mxu0
    %153 = vdwg.mxu0
    %v154 = vld [vmem:[#allocation7] sm:$0xff]
    %v155 = vld [vmem:[#allocation7 + $0x8] sm:$0xff]
    %v156 = vadd.f32 %v146, %v154
    %v157 = vadd.f32 %v151, %v155
    %158 = vmax.xlane.f32.xlu0 %v156
    %v159 = vpop.xlane.xlu0 %158
    %160 = vmax.xlane.f32.xlu0 %v157
    %v161 = vpop.xlane.xlu0 %160
    %v162 = vsub.f32 %v156, %v159
    %v163 = vsub.f32 %v157, %v161
    %v164 = vmul.f32 %v162, 1.442695
    %v165 = vpow.pop %v164
    %v166 = vmul.f32 %v163, 1.442695
    %v167 = vpow.pop %v166
    %168 = vadd.xlane.f32.xlu0 %v165
    %v169 = vpop.xlane.xlu0 %168
    %170 = vadd.xlane.f32.xlu0 %v167
    %v171 = vpop.xlane.xlu0 %170
    %v172 = vrcp.pop %v169
    %v173 = vmul.f32 1.0, %v172
    %v174 = vrcp.pop %v171
    %v175 = vmul.f32 1.0, %v174
    %v176 = vmul.f32 %v165, %v173
    %v177 = vmul.f32 %v167, %v175
    %178 = vst [vmem:[#allocation8] sm:$0xff] %v176
    %179 = vst [vmem:[#allocation8 + $0x8] sm:$0xff] %v177
    // Predicated region
    $region30: #{tpu_custom_call.1} parent=1 // pred_check
      _
    $region31: #{tpu_custom_call.1} parent=1 // pred_check_branch
      %181 = sbr.rel (0) target = $region33
    $region32: #{tpu_custom_call.1} parent=1 // pred_region
      %s183 = ssub.s32 256, 256
      %184 = vsyncadd [#allocation4], %s183
      %s185 = sshll.u32 [#allocation8], 4
      %s186 = int_to_ptr.vmem [resolvable:$true] %s185
      %191 = dma.vmem_to_hbm [thread:$0]  %s186, 256, %s4, [#allocation4], 128, 128, 8
    $region33: #{tpu_custom_call.1} parent=1 // pred_fallthru
      _
    // Predicated region
    $region34: #{tpu_custom_call.1} parent=1 // pred_check
      _
    $region35: #{tpu_custom_call.1} parent=1 // pred_check_branch
      %193 = sbr.rel (0) target = $region37
    $region36: #{tpu_custom_call.1} parent=1 // pred_region
      %194 = dma.done [#allocation4], 256
    $region37: #{tpu_custom_call.1} parent=1 // pred_fallthru
      _
    %195 = vsyncpa [#allocation3], 1
    %196 = vsyncpa [#allocation6], 1
    %197 = vsyncpa [#allocation4], 1

</llo_original>
